<compile_context>
chip_gen: v5e
topology: v5e:2x2
jax: 0.10.0
libtpu: 0.0.40
codegen_flags: <defaults>
</compile_context>

<pallas_src>
import functools

import jax
import jax.numpy as jnp
from jax.experimental import pallas as pl
from jax.experimental.pallas import tpu as pltpu

EPS = float(jnp.finfo(jnp.float32).eps)  # matches torch.finfo(torch.float32).eps

_LANE = 128
_SUBL = 8


def _round_up(x, m):
    return ((x + m - 1) // m) * m


def _round_down(x, m):
    return (x // m) * m


def _sublane_granularity(dtype):
    # f32 -> 8, bf16 -> 16, int8/fp8 -> 32
    return _SUBL * max(1, 4 // jnp.dtype(dtype).itemsize)


def _default_target_block_bytes():
    # v7x (~3.2 TB/s HBM, 64 MiB VMEM) wants ~4 MiB blocks to amortize the
    # ~0.35 us/grid-step overhead; v5e/v6e (<=1.4 TB/s, 128 MiB VMEM) are on
    # the HBM roofline already at ~2 MiB.  Keyed off physical VMEM capacity.
    try:
        info = pltpu.get_tpu_info()
        vmem = getattr(info, "vmem_capacity_bytes", None)
        if vmem is not None and vmem <= 80 * 1024 * 1024:  # v7x-class (64 MiB)
            return 4 * 1024 * 1024
    except Exception:
        pass
    return 2 * 1024 * 1024


def _compiler_params(block_vmem_bytes, n_grid_axes):
    # vmem_limit is only a cap: generous headroom over 2x(in+out) double
    # buffers + in-kernel f32 temporaries, never above v7x's 64 MiB physical.
    limit = int(min(64 * 1024 * 1024,
                    max(32 * 1024 * 1024, 12 * block_vmem_bytes)))
    return pltpu.CompilerParams(
        dimension_semantics=("parallel",) * n_grid_axes,
        vmem_limit_bytes=limit,
    )


def _cln_kernel(y_ref, gamma_ref, beta_ref, out_ref, *, axis):
    """Normalize over `axis` of the block; gamma/beta broadcast along it."""
    y = y_ref[...].astype(jnp.float32)
    mean = jnp.mean(y, axis=axis, keepdims=True)
    mean_sq = jnp.mean(y * y, axis=axis, keepdims=True)
    var = jnp.maximum(mean_sq - mean * mean, 0.0)       # one-pass, clamped
    inv_std = jax.lax.rsqrt(var + EPS)
    g = gamma_ref[...].astype(jnp.float32)
    b = beta_ref[...].astype(jnp.float32)
    out_ref[...] = ((y - mean) * inv_std * g + b).astype(out_ref.dtype)


def _cln_bdtf(y, gamma, beta, target_block_bytes):
    M, N, T, K = y.shape
    L = T * K
    itemsize = jnp.dtype(y.dtype).itemsize
    sub = _sublane_granularity(y.dtype)
    target = target_block_bytes or _default_target_block_bytes()

    if (N % sub != 0) and (L % _LANE == 0) and (L // _LANE >= 1):
        # Small / ragged channel count: put spatial on (sublane, lane) so every
        # vreg and DMA'd byte is dense; channel reduction becomes VALU adds.
        rows = L // _LANE
        y4 = y.reshape(M, N, rows, _LANE)
        tr = max(_SUBL, _round_down(target // (N * _LANE * itemsize), _SUBL))
        tr = rows if tr >= rows else tr
        blk_vmem = N * _round_up(tr, sub) * _LANE * itemsize
        out4 = pl.pallas_call(
            functools.partial(_cln_kernel, axis=1),
            out_shape=jax.ShapeDtypeStruct((M, N, rows, _LANE), y.dtype),
            grid_spec=pl.GridSpec(
                grid=(M, pl.cdiv(rows, tr)),
                in_specs=[
                    pl.BlockSpec((1, N, tr, _LANE), lambda m, c: (m, 0, c, 0)),
                    pl.BlockSpec((1, N, 1, 1), lambda m, c: (0, 0, 0, 0)),
                    pl.BlockSpec((1, N, 1, 1), lambda m, c: (0, 0, 0, 0)),
                ],
                out_specs=pl.BlockSpec((1, N, tr, _LANE),
                                       lambda m, c: (m, 0, c, 0)),
            ),
            compiler_params=_compiler_params(blk_vmem, 2),
        )(y4, gamma.reshape(1, N, 1, 1), beta.reshape(1, N, 1, 1))
        return out4.reshape(M, N, T, K)

    # Generic path: full channel axis resident, lane-dense spatial chunks,
    # ragged last chunk handled by Pallas (masked store, no pad/slice).
    y3 = y.reshape(M, N, L)
    tl = max(_LANE,
             _round_down(target // (_round_up(N, sub) * itemsize), _LANE))
    tl = L if tl >= L else tl
    blk_vmem = _round_up(N, sub) * _round_up(tl, _LANE) * itemsize
    out3 = pl.pallas_call(
        functools.partial(_cln_kernel, axis=1),
        out_shape=jax.ShapeDtypeStruct((M, N, L), y.dtype),
        grid_spec=pl.GridSpec(
            grid=(M, pl.cdiv(L, tl)),
            in_specs=[
                pl.BlockSpec((1, N, tl), lambda m, c: (m, 0, c)),
                pl.BlockSpec((1, N, 1), lambda m, c: (0, 0, 0)),
                pl.BlockSpec((1, N, 1), lambda m, c: (0, 0, 0)),
            ],
            out_specs=pl.BlockSpec((1, N, tl), lambda m, c: (m, 0, c)),
        ),
        compiler_params=_compiler_params(blk_vmem, 2),
    )(y3, gamma.reshape(1, N, 1), beta.reshape(1, N, 1))
    return out3.reshape(M, N, T, K)


def _cln_btfd(y, gamma, beta, target_block_bytes):
    # Native BTFD: normalize over the last (lane) axis on (M*T*K, N) rows.
    # No moveaxis round trip.  The channel block is always full-extent, so the
    # only ragged axis is rows (sublanes) -> safe with the lane reduction.
    M, T, K, N = y.shape
    R = M * T * K
    itemsize = jnp.dtype(y.dtype).itemsize
    sub = _sublane_granularity(y.dtype)
    target = target_block_bytes or _default_target_block_bytes()

    y2 = y.reshape(R, N)
    bytes_per_row = _round_up(N, _LANE) * itemsize      # VMEM lane padding
    tr = max(sub, _round_down(target // bytes_per_row, sub))
    tr = R if tr >= R else tr
    blk_vmem = _round_up(tr, sub) * _round_up(N, _LANE) * itemsize
    out2 = pl.pallas_call(
        functools.partial(_cln_kernel, axis=-1),
        out_shape=jax.ShapeDtypeStruct((R, N), y.dtype),
        grid_spec=pl.GridSpec(
            grid=(pl.cdiv(R, tr),),
            in_specs=[
                pl.BlockSpec((tr, N), lambda r: (r, 0)),
                pl.BlockSpec((1, N), lambda r: (0, 0)),
                pl.BlockSpec((1, N), lambda r: (0, 0)),
            ],
            out_specs=pl.BlockSpec((tr, N), lambda r: (r, 0)),
        ),
        compiler_params=_compiler_params(blk_vmem, 1),
    )(y2, gamma.reshape(1, N), beta.reshape(1, N))
    return out2.reshape(M, T, K, N)


def channelwise_layer_norm(y, gamma, beta, shape="BDTF", *,
                           target_block_bytes=None):
    """Channel-wise LayerNorm (normalization over the channel axis).

    Args:
        y: [M, N, T, K] (shape == 'BDTF') or [M, T, K, N] (shape == 'BTFD')
        gamma, beta: [1, N, 1, 1]
    Returns:
        Same shape/layout/dtype as y.
    """
    assert y.ndim == 4
    assert shape in ("BDTF", "BTFD"), shape
    if shape == "BTFD":
        return _cln_btfd(y, gamma, beta, target_block_bytes)
    return _cln_bdtf(y, gamma, beta, target_block_bytes)


def _reference(y, gamma, beta, shape="BDTF"):
    if shape == "BTFD":
        y = jnp.moveaxis(y, -1, 1)
    mean = jnp.mean(y, axis=1, keepdims=True)
    var = jnp.mean((y - mean) ** 2, axis=1, keepdims=True)
    out = gamma * (y - mean) / jnp.sqrt(var + EPS) + beta
    if shape == "BTFD":
        out = jnp.moveaxis(out, 1, -1)
    return out


def _check(out, ref):
    assert out.shape == ref.shape and out.dtype == ref.dtype
    assert jnp.allclose(out, ref, atol=1e-5, rtol=1e-5)


if __name__ == "__main__":
    # Small shapes consistent with the module's forward: [M, N, T, K]
    M, N, T, K = 2, 4, 16, 16
    key = jax.random.PRNGKey(0)
    k1, k2, k3 = jax.random.split(key, 3)
    y = jax.random.normal(k1, (M, N, T, K), dtype=jnp.float32)
    # reset_parameters() gives gamma=1, beta=0; perturb deterministically so the
    # affine path is actually exercised.
    gamma = 1.0 + 0.1 * jax.random.normal(k2, (1, N, 1, 1), dtype=jnp.float32)
    beta = 0.1 * jax.random.normal(k3, (1, N, 1, 1), dtype=jnp.float32)

    # BDTF (small-N dense 4-D path)
    out = jax.block_until_ready(channelwise_layer_norm(y, gamma, beta, "BDTF"))
    _check(out, _reference(y, gamma, beta, "BDTF"))

    # BTFD (native lane-reduction path, no moveaxis)
    y_btfd = jnp.moveaxis(y, 1, -1)
    out2 = jax.block_until_ready(
        channelwise_layer_norm(y_btfd, gamma, beta, "BTFD"))
    _check(out2, _reference(y_btfd, gamma, beta, "BTFD"))

    # Generic BDTF path (N multiple of 8), single full-extent chunk.
    N2 = 8
    y2 = jax.random.normal(k1, (M, N2, T, K), dtype=jnp.float32)
    g2 = jnp.ones((1, N2, 1, 1), jnp.float32)
    b2 = jnp.zeros((1, N2, 1, 1), jnp.float32)
    out3 = jax.block_until_ready(channelwise_layer_norm(y2, g2, b2, "BDTF"))
    _check(out3, _reference(y2, g2, b2, "BDTF"))

    # Ragged-tail coverage (forced tiny tiles): generic BDTF with L % tile != 0.
    y4 = jax.random.normal(k2, (2, 8, 16, 20), dtype=jnp.float32)  # L=320
    out4 = jax.block_until_ready(
        channelwise_layer_norm(y4, g2, b2, "BDTF", target_block_bytes=4096))
    _check(out4, _reference(y4, g2, b2, "BDTF"))

    # Ragged-tail coverage: BTFD with row count not a multiple of the tile.
    y5 = jax.random.normal(k3, (1, 15, 21, 4), dtype=jnp.float32)  # R=315
    out5 = jax.block_until_ready(
        channelwise_layer_norm(y5, gamma, beta, "BTFD", target_block_bytes=4096))
    _check(out5, _reference(y5, gamma, beta, "BTFD"))

    print("KERNEL_OK")
</pallas_src>

<mosaic_0001>
module attributes {stable_mosaic.version = 11 : i64} {
  func.func @_cln_kernel(%arg0: i32, %arg1: i32, %arg2: memref<1x4x2x128xf32, #tpu.memory_space<vmem>>, %arg3: memref<1x4x1x1xf32, #tpu.memory_space<vmem>>, %arg4: memref<1x4x1x1xf32, #tpu.memory_space<vmem>>, %arg5: memref<1x4x2x128xf32, #tpu.memory_space<vmem>>) attributes {dimension_semantics = [#tpu.dimension_semantics<parallel>, #tpu.dimension_semantics<parallel>], iteration_bounds = array<i64: 2, 1>, scalar_prefetch = 0 : i64, scratch_operands = 0 : i64, tpu.core_type = #tpu.core_type<tc>, window_params = [{transform_indices = @transform_0, window_bounds = array<i64: 1, 4, 2, 128>}, {pipeline_mode = #tpu.pipeline_mode<synchronous>, transform_indices = @transform_1, window_bounds = array<i64: 1, 4, 1, 1>}, {pipeline_mode = #tpu.pipeline_mode<synchronous>, transform_indices = @transform_2, window_bounds = array<i64: 1, 4, 1, 1>}, {transform_indices = @transform_3, window_bounds = array<i64: 1, 4, 2, 128>}]} {
    %c0 = arith.constant 0 : index
    %c0_0 = arith.constant 0 : index
    %c0_1 = arith.constant 0 : index
    %c0_2 = arith.constant 0 : index
    %0 = vector.load %arg2[%c0, %c0_0, %c0_1, %c0_2] : memref<1x4x2x128xf32, #tpu.memory_space<vmem>>, vector<1x4x2x128xf32>
    %cst = arith.constant dense<0.000000e+00> : vector<1x2x128xf32>
    %1 = vector.multi_reduction <add>, %0, %cst [1] : vector<1x4x2x128xf32> to vector<1x2x128xf32>
    %2 = vector.shape_cast %1 : vector<1x2x128xf32> to vector<1x1x2x128xf32>
    %cst_3 = arith.constant 4.000000e+00 : f32
    %3 = vector.broadcast %cst_3 : f32 to vector<1x1x2x128xf32>
    %4 = arith.divf %2, %3 : vector<1x1x2x128xf32>
    %5 = arith.mulf %0, %0 : vector<1x4x2x128xf32>
    %cst_4 = arith.constant dense<0.000000e+00> : vector<1x2x128xf32>
    %6 = vector.multi_reduction <add>, %5, %cst_4 [1] : vector<1x4x2x128xf32> to vector<1x2x128xf32>
    %7 = vector.shape_cast %6 : vector<1x2x128xf32> to vector<1x1x2x128xf32>
    %cst_5 = arith.constant 4.000000e+00 : f32
    %8 = vector.broadcast %cst_5 : f32 to vector<1x1x2x128xf32>
    %9 = arith.divf %7, %8 : vector<1x1x2x128xf32>
    %10 = arith.mulf %4, %4 : vector<1x1x2x128xf32>
    %11 = arith.subf %9, %10 : vector<1x1x2x128xf32>
    %cst_6 = arith.constant 0.000000e+00 : f32
    %12 = vector.broadcast %cst_6 : f32 to vector<1x1x2x128xf32>
    %13 = arith.maximumf %11, %12 : vector<1x1x2x128xf32>
    %cst_7 = arith.constant 1.1920929E-7 : f32
    %14 = vector.broadcast %cst_7 : f32 to vector<1x1x2x128xf32>
    %15 = arith.addf %13, %14 : vector<1x1x2x128xf32>
    %16 = math.rsqrt %15 : vector<1x1x2x128xf32>
    %c0_8 = arith.constant 0 : index
    %c0_9 = arith.constant 0 : index
    %c0_10 = arith.constant 0 : index
    %c0_11 = arith.constant 0 : index
    %17 = vector.load %arg3[%c0_8, %c0_9, %c0_10, %c0_11] : memref<1x4x1x1xf32, #tpu.memory_space<vmem>>, vector<1x4x1x1xf32>
    %c0_12 = arith.constant 0 : index
    %c0_13 = arith.constant 0 : index
    %c0_14 = arith.constant 0 : index
    %c0_15 = arith.constant 0 : index
    %18 = vector.load %arg4[%c0_12, %c0_13, %c0_14, %c0_15] : memref<1x4x1x1xf32, #tpu.memory_space<vmem>>, vector<1x4x1x1xf32>
    %19 = vector.broadcast %4 : vector<1x1x2x128xf32> to vector<1x4x2x128xf32>
    %20 = arith.subf %0, %19 : vector<1x4x2x128xf32>
    %21 = vector.broadcast %16 : vector<1x1x2x128xf32> to vector<1x4x2x128xf32>
    %22 = arith.mulf %20, %21 : vector<1x4x2x128xf32>
    %23 = vector.broadcast %17 : vector<1x4x1x1xf32> to vector<1x4x2x128xf32>
    %24 = arith.mulf %22, %23 : vector<1x4x2x128xf32>
    %25 = vector.broadcast %18 : vector<1x4x1x1xf32> to vector<1x4x2x128xf32>
    %26 = arith.addf %24, %25 : vector<1x4x2x128xf32>
    %c0_16 = arith.constant 0 : index
    %c0_17 = arith.constant 0 : index
    %c0_18 = arith.constant 0 : index
    %c0_19 = arith.constant 0 : index
    %27 = vector.load %arg5[%c0_16, %c0_17, %c0_18, %c0_19] : memref<1x4x2x128xf32, #tpu.memory_space<vmem>>, vector<1x4x2x128xf32>
    tpu.vector_store %arg5[%c0_16, %c0_17, %c0_18, %c0_19], %26 {strides = array<i32>} : memref<1x4x2x128xf32, #tpu.memory_space<vmem>>, vector<1x4x2x128xf32>,
    return
  }
  func.func @transform_0(%arg0: i32, %arg1: i32) -> (i32, i32, i32, i32) {
    %c0_i32 = arith.constant 0 : i32
    %c0_i32_0 = arith.constant 0 : i32
    %c0_i32_1 = arith.constant 0 : i32
    return %arg0, %c0_i32, %arg1, %c0_i32_0 : i32, i32, i32, i32
  }
  func.func @transform_1(%arg0: i32, %arg1: i32) -> (i32, i32, i32, i32) {
    %c0_i32 = arith.constant 0 : i32
    %c0_i32_0 = arith.constant 0 : i32
    %c0_i32_1 = arith.constant 0 : i32
    %c0_i32_2 = arith.constant 0 : i32
    %c0_i32_3 = arith.constant 0 : i32
    return %c0_i32, %c0_i32_0, %c0_i32_1, %c0_i32_2 : i32, i32, i32, i32
  }
  func.func @transform_2(%arg0: i32, %arg1: i32) -> (i32, i32, i32, i32) {
    %c0_i32 = arith.constant 0 : i32
    %c0_i32_0 = arith.constant 0 : i32
    %c0_i32_1 = arith.constant 0 : i32
    %c0_i32_2 = arith.constant 0 : i32
    %c0_i32_3 = arith.constant 0 : i32
    return %c0_i32, %c0_i32_0, %c0_i32_1, %c0_i32_2 : i32, i32, i32, i32
  }
  func.func @transform_3(%arg0: i32, %arg1: i32) -> (i32, i32, i32, i32) {
    %c0_i32 = arith.constant 0 : i32
    %c0_i32_0 = arith.constant 0 : i32
    %c0_i32_1 = arith.constant 0 : i32
    return %arg0, %c0_i32, %arg1, %c0_i32_0 : i32, i32, i32, i32
  }
}

</mosaic_0001>

<llo_original>
// kernel: tpu_custom_call.1
$region0: #{tpu_custom_call.1}
  #allocation0 [shape = 'u32[]', space=smem, size = 0x4, offset = 0x4, fixed_abs, tag = 'smem constant byte address 0x4 - core index']
  #allocation1 [shape = 'u32[72,128]{1,0:T(1,128)}', space=vmem, size = 0x9000, scoped, tag = 'internal scratch']
  %s0 = inlined_call_operand.hbm [shape: f32[2,4,2,128], index: 0, kind: input, shape index: {}]
  %s1 = inlined_call_operand.vmem [shape: f32[1,4,1,1], index: 1, kind: input, shape index: {}]
  %s2 = inlined_call_operand.vmem [shape: f32[1,4,1,1], index: 2, kind: input, shape index: {}]
  %s3 = inlined_call_operand.hbm [shape: f32[2,4,2,128], index: 3, kind: output, shape index: {}]
  %s4 = sld [smem:[#allocation0]]
  $region49: #{tpu_custom_call.1} parent=0
    _
  %s6 = ssub.s32 1, %s4
  %s7 = scalar_select 0, %s6, %s4
  $region1: #{tpu_custom_call.1} parent=0
    #allocation2 [shape = 'u8[8192]{0}', space=vmem, size = 0x2000, scoped, tag = 'input window, operand 0']
    #allocation3 [shape = 's32[2]{0}', space=sflag, size = 0x8, scoped, tag = 'scoped memory for tpu_custom_call.1']
    #allocation4 [shape = 's32[2]{0}', space=sflag, size = 0x8, scoped, tag = 'scoped memory for tpu_custom_call.1']
    #allocation5 [shape = 'u8[8192]{0}', space=vmem, size = 0x2000, scoped, tag = 'output window, operand 0']
    %8 = vsyncpa [#allocation3], 0
    %s9 = scalar_lea.sflag [#allocation3], 1
    %10 = vsyncpa %s9, 0
    %11 = vsyncpa [#allocation4], 0
    %s12 = scalar_lea.sflag [#allocation4], 1
    %13 = vsyncpa %s12, 0
    loop: start=0, step=1, limit=4
    $region2: #{tpu_custom_call.1} parent=1 // loop_pre_header
      _
    $region3: #{tpu_custom_call.1} parent=1 // loop_header
      %s15 = sphi 0, %s19
      %p16 = scmp.ge.s32.totalorder %s15, 4
      %s22 = sphi 0, %s34
      %s23 = sphi 0, %s30
      %s24 = sphi 0, %s22
      %s25 = sphi 0, %s23
      %s26 = sphi 0, %s24
      %s27 = sphi 0, %s25
      %s39 = sphi 0, %s41
      %s42 = sphi 0, %s39
      %s43 = sphi 0, %s42
      %s59 = sphi 0, %s43
      %s63 = sphi 0, %s63
      %s65 = sphi 0, %s63
      %s66 = sphi 0, %s65
      %s80 = sphi 0, %s66
      %s84 = sphi 0, %s84
      %s86 = sphi 0, %s84
      %s87 = sphi 0, %s86
      %s101 = sphi 0, %s87
      %s109 = sphi 0, %s111
      %s112 = sphi 0, %s109
      %s113 = sphi 0, %s112
      %s129 = sphi 0, %s113
    $region4: #{tpu_custom_call.1} parent=1 // loop_header_branch
      %18 = sbr.rel (%p16) target = $region8
    $region5: #{tpu_custom_call.1} parent=1 // loop_body
      %s20 = ssub.s32 %s15, 1
      %s21 = ssub.s32 %s15, 2
      %s28 = sadd.s32 1, %s23
      %p29 = scmp.ge.s32.totalorder %s28, 1
      %s30 = scalar_select %p29, 0, %s28
      %s31 = sadd.s32 1, %s22
      %s32 = scalar_select %p29, %s31, %s22
      %p33 = scmp.ge.s32.totalorder %s32, 2
      %s34 = scalar_select %p33, 0, %s32
      %s35 = ssub.s32 %s22, %s34
      %s36 = ssub.s32 %s23, %s30
      %s37 = sor.u32 %s35, %s36
      %p38 = scmp.eq.s32.totalorder %s37, 0
      %s40 = sadd.s32 %s39, 1
      %s41 = scalar_select %p38, %s39, %s40
      %p44 = pneg %p38
      %p45 = scmp.eq.s32.totalorder %s15, 1
      %p46 = por %p44, %p45
      %p47 = scmp.ne.s32.totalorder %s39, %s42
      %p48 = scmp.eq.s32.totalorder %s15, 0
      %p49 = por %p47, %p48
      %p50 = scmp.ne.s32.totalorder %s39, %s42
      %p51 = scmp.eq.s32.totalorder %s20, 1
      %p52 = por %p50, %p51
      %p53 = scmp.ne.s32.totalorder %s42, %s43
      %p54 = scmp.eq.s32.totalorder %s20, 0
      %p55 = por %p53, %p54
      %p56 = scmp.ne.s32.totalorder %s42, %s43
      %p57 = scmp.eq.s32.totalorder %s21, 1
      %p58 = por %p56, %p57
      %p60 = scmp.ne.s32.totalorder %s43, %s59
      %p61 = scmp.eq.s32.totalorder %s21, 0
      %p62 = por %p60, %p61
      %s64 = sadd.s32 %s63, 1
      %p67 = scmp.eq.s32.totalorder %s15, 1
      %p68 = scmp.ne.s32.totalorder %s63, %s65
      %p69 = scmp.eq.s32.totalorder %s15, 0
      %p70 = por %p68, %p69
      %p71 = scmp.ne.s32.totalorder %s63, %s65
      %p72 = scmp.eq.s32.totalorder %s20, 1
      %p73 = por %p71, %p72
      %p74 = scmp.ne.s32.totalorder %s65, %s66
      %p75 = scmp.eq.s32.totalorder %s20, 0
      %p76 = por %p74, %p75
      %p77 = scmp.ne.s32.totalorder %s65, %s66
      %p78 = scmp.eq.s32.totalorder %s21, 1
      %p79 = por %p77, %p78
      %p81 = scmp.ne.s32.totalorder %s66, %s80
      %p82 = scmp.eq.s32.totalorder %s21, 0
      %p83 = por %p81, %p82
      %s85 = sadd.s32 %s84, 1
      %p88 = scmp.eq.s32.totalorder %s15, 1
      %p89 = scmp.ne.s32.totalorder %s84, %s86
      %p90 = scmp.eq.s32.totalorder %s15, 0
      %p91 = por %p89, %p90
      %p92 = scmp.ne.s32.totalorder %s84, %s86
      %p93 = scmp.eq.s32.totalorder %s20, 1
      %p94 = por %p92, %p93
      %p95 = scmp.ne.s32.totalorder %s86, %s87
      %p96 = scmp.eq.s32.totalorder %s20, 0
      %p97 = por %p95, %p96
      %p98 = scmp.ne.s32.totalorder %s86, %s87
      %p99 = scmp.eq.s32.totalorder %s21, 1
      %p100 = por %p98, %p99
      %p102 = scmp.ne.s32.totalorder %s87, %s101
      %p103 = scmp.eq.s32.totalorder %s21, 0
      %p104 = por %p102, %p103
      %s105 = ssub.s32 %s22, %s34
      %s106 = ssub.s32 %s23, %s30
      %s107 = sor.u32 %s105, %s106
      %p108 = scmp.eq.s32.totalorder %s107, 0
      %s110 = sadd.s32 %s109, 1
      %s111 = scalar_select %p108, %s109, %s110
      %p114 = pneg %p108
      %p115 = scmp.eq.s32.totalorder %s15, 1
      %p116 = por %p114, %p115
      %p117 = scmp.ne.s32.totalorder %s109, %s112
      %p118 = scmp.eq.s32.totalorder %s15, 0
      %p119 = por %p117, %p118
      %p120 = scmp.ne.s32.totalorder %s109, %s112
      %p121 = scmp.eq.s32.totalorder %s20, 1
      %p122 = por %p120, %p121
      %p123 = scmp.ne.s32.totalorder %s112, %s113
      %p124 = scmp.eq.s32.totalorder %s20, 0
      %p125 = por %p123, %p124
      %p126 = scmp.ne.s32.totalorder %s112, %s113
      %p127 = scmp.eq.s32.totalorder %s21, 1
      %p128 = por %p126, %p127
      %p130 = scmp.ne.s32.totalorder %s113, %s129
      %p131 = scmp.eq.s32.totalorder %s21, 0
      %p132 = por %p130, %p131
      %p133 = scmp.le.s32.totalorder 1, %s15
      %p134 = scmp.lt.s32.totalorder %s15, 3
      %p135 = pnand %p133, %p134
      %p136 = pneg %p135
      // Predicated region
      $region9: #{tpu_custom_call.1} parent=5 // pred_check
        _
      $region10: #{tpu_custom_call.1} parent=5 // pred_check_branch
        %138 = sbr.rel (%p135) target = $region12
      $region11: #{tpu_custom_call.1} parent=5 // pred_region
        %s139 = ssub.s32 %s15, 1
        // Predicated region
        $region13: #{tpu_custom_call.1} parent=11 // pred_check
          %p140 = pneg %p76
        $region14: #{tpu_custom_call.1} parent=11 // pred_check_branch
          %142 = sbr.rel (%p140) target = $region16
        $region15: #{tpu_custom_call.1} parent=11 // pred_region
          _
        $region16: #{tpu_custom_call.1} parent=11 // pred_fallthru
          _
        // Predicated region
        $region17: #{tpu_custom_call.1} parent=11 // pred_check
          %p143 = pneg %p97
        $region18: #{tpu_custom_call.1} parent=11 // pred_check_branch
          %145 = sbr.rel (%p143) target = $region20
        $region19: #{tpu_custom_call.1} parent=11 // pred_region
          _
        $region20: #{tpu_custom_call.1} parent=11 // pred_fallthru
          _
      $region12: #{tpu_custom_call.1} parent=5 // pred_fallthru
        _
      %p146 = scmp.lt.s32.totalorder %s15, 2
      // Predicated region
      $region21: #{tpu_custom_call.1} parent=5 // pred_check
        %p147 = pneg %p146
      $region22: #{tpu_custom_call.1} parent=5 // pred_check_branch
        %149 = sbr.rel (%p147) target = $region24
      $region23: #{tpu_custom_call.1} parent=5 // pred_region
        // Predicated region
        $region25: #{tpu_custom_call.1} parent=23 // pred_check
          %p150 = pneg %p49
        $region26: #{tpu_custom_call.1} parent=23 // pred_check_branch
          %152 = sbr.rel (%p150) target = $region28
        $region27: #{tpu_custom_call.1} parent=23 // pred_region
          %s153 = sand.u32 %s39, 1
          %s154 = scalar_lea.sflag [#allocation3], %s153
          %s155 = sand.u32 %s39, 1
          %s156 = smul.addr %s155, 8
          %s157 = scalar_lea.vmem [#allocation2], %s156
          %159 = vsyncadd %s154, 0
          %s160 = smul.addr %s22, 4
          %s161 = sadd.s32 %s23, %s160
          %s162 = smul.addr %s161, 2
          %s163 = scalar_lea.hbm %s0, %s162
          %s164 = sshll.u32 %s163, 4
          %s165 = int_to_ptr.hbm [resolvable:$true] %s164
          %s166 = sshll.u32 %s157, 4
          %s167 = int_to_ptr.vmem [resolvable:$true] %s166
          %172 = dma.hbm_to_vmem [thread:$0]  %s165, 128, %s167, %s154, 32, 32, 2
        $region28: #{tpu_custom_call.1} parent=23 // pred_fallthru
          _
      $region24: #{tpu_custom_call.1} parent=5 // pred_fallthru
        _
      %p173 = scmp.le.s32.totalorder 1, %s15
      %p174 = scmp.lt.s32.totalorder %s15, 3
      %p175 = pnand %p173, %p174
      %p176 = pneg %p175
      // Predicated region
      $region29: #{tpu_custom_call.1} parent=5 // pred_check
        _
      $region30: #{tpu_custom_call.1} parent=5 // pred_check_branch
        %178 = sbr.rel (%p175) target = $region32
      $region31: #{tpu_custom_call.1} parent=5 // pred_region
        %s179 = ssub.s32 %s15, 1
        %s180 = sand.u32 %s42, 1
        %s181 = scalar_lea.sflag [#allocation3], %s180
        %s182 = sand.u32 %s42, 1
        %s183 = smul.addr %s182, 8
        %s184 = scalar_lea.vmem [#allocation2], %s183
        // Predicated region
        $region33: #{tpu_custom_call.1} parent=31 // pred_check
          %p185 = pneg %p55
        $region34: #{tpu_custom_call.1} parent=31 // pred_check_branch
          %187 = sbr.rel (%p185) target = $region36
        $region35: #{tpu_custom_call.1} parent=31 // pred_region
          %189 = dma.done %s181, 128
        $region36: #{tpu_custom_call.1} parent=31 // pred_fallthru
          _
        %s190 = sand.u32 %s42, 1
        %s191 = scalar_lea.sflag [#allocation3], %s190
        %s192 = sand.u32 %s42, 1
        %s193 = smul.addr %s192, 8
        %s194 = scalar_lea.vmem [#allocation2], %s193
        %p195 = pneg %p55
        %p196 = pneg %p52
        %p197 = pneg %p76
        %p198 = pneg %p73
        %p199 = pneg %p97
        %p200 = pneg %p94
        %p201 = pneg %p125
        %p202 = pneg %p122
        %s203 = sand.u32 %s112, 1
        %s204 = scalar_lea.sflag [#allocation4], %s203
        %s205 = sand.u32 %s112, 1
        %s206 = smul.addr %s205, 8
        %s207 = scalar_lea.vmem [#allocation5], %s206
        %v208 = vld [vmem:[%s184] sm:$0x3]
        %v209 = vld [vmem:[%s184 + $0x2] sm:$0x3]
        %v210 = vld [vmem:[%s184 + $0x4] sm:$0x3]
        %v211 = vld [vmem:[%s184 + $0x6] sm:$0x3]
        %vm212 = vcmask 1041408
        %v213 = vsel %vm212, %v208, 0.0
        %v214 = vsel %vm212, %v209, 0.0
        %v215 = vadd.f32 %v213, %v214
        %v216 = vsel %vm212, %v210, 0.0
        %v217 = vadd.f32 %v215, %v216
        %v218 = vsel %vm212, %v211, 0.0
        %v219 = vadd.f32 %v217, %v218
        %v220 = vrcp.pop 4.0
        %v221 = vmul.f32 4.0, %v220
        %v222 = vsub.f32 1.0, %v221
        %v223 = vmul.f32 %v220, %v222
        %v224 = vadd.f32 %v220, %v223
        %vm225 = vweird.f32 %v220
        %v226 = vsel %vm225, %v220, %v224
        %v227 = vmul.f32 %v219, %v226
        %v228 = vmul.f32 %v208, %v208
        %v229 = vmul.f32 %v209, %v209
        %v230 = vmul.f32 %v210, %v210
        %v231 = vmul.f32 %v211, %v211
        %v232 = vsel %vm212, %v228, 0.0
        %v233 = vsel %vm212, %v229, 0.0
        %v234 = vadd.f32 %v232, %v233
        %v235 = vsel %vm212, %v230, 0.0
        %v236 = vadd.f32 %v234, %v235
        %v237 = vsel %vm212, %v231, 0.0
        %v238 = vadd.f32 %v236, %v237
        %v239 = vmul.f32 %v238, %v226
        %v240 = vmul.f32 %v227, %v227
        %v241 = vsub.f32 %v239, %v240
        %v242 = vmax.f32 %v241, 0.0
        %v243 = vadd.f32 %v242, 1.1920929e-07
        %v244 = vrsqrt.pop %v243
        %v245 = vmul.f32 %v244, %v243
        %v246 = vmul.f32 %v245, %v244
        %v247 = vmul.f32 0.5, %v246
        %v248 = vsub.f32 1.5, %v247
        %v249 = vmul.f32 %v244, %v248
        %vm250 = vweird.f32 %v243
        %vm251 = vweird.f32 %v244
        %vm252 = vmor %vm250, %vm251
        %v253 = vsel %vm252, %v244, %v249
        %v254 = vld [vmem:[%s1] sm:$0x1]
        %v255 = vld [vmem:[%s1 + $0x1] sm:$0x1]
        %v256 = vld [vmem:[%s1 + $0x2] sm:$0x1]
        %v257 = vld [vmem:[%s1 + $0x3] sm:$0x1]
        %v258 = vld [vmem:[%s2] sm:$0x1]
        %v259 = vld [vmem:[%s2 + $0x1] sm:$0x1]
        %v260 = vld [vmem:[%s2 + $0x2] sm:$0x1]
        %v261 = vld [vmem:[%s2 + $0x3] sm:$0x1]
        %v262 = vsub.f32 %v208, %v227
        %v263 = vsub.f32 %v209, %v227
        %v264 = vsub.f32 %v210, %v227
        %v265 = vsub.f32 %v211, %v227
        %v266 = vmul.f32 %v262, %v253
        %v267 = vmul.f32 %v263, %v253
        %v268 = vmul.f32 %v264, %v253
        %v269 = vmul.f32 %v265, %v253
        %v274 = vperm.slane %v254, 0
        %v275 = vperm.slane %v255, 0
        %v276 = vperm.slane %v256, 0
        %v277 = vperm.slane %v257, 0
        %278 = vset.pattern.permute.xlu0 0
        %279 = vperm.xlu0 %278, %v274
        %v280 = vpop.permute.xlu0 %279
        %282 = vset.pattern.permute.xlu0 0
        %283 = vperm.xlu0 %282, %v275
        %v284 = vpop.permute.xlu0 %283
        %286 = vset.pattern.permute.xlu0 0
        %287 = vperm.xlu0 %286, %v276
        %v288 = vpop.permute.xlu0 %287
        %290 = vset.pattern.permute.xlu0 0
        %291 = vperm.xlu0 %290, %v277
        %v292 = vpop.permute.xlu0 %291
        %v294 = vmul.f32 %v266, %v280
        %v295 = vmul.f32 %v267, %v284
        %v296 = vmul.f32 %v268, %v288
        %v297 = vmul.f32 %v269, %v292
        %v302 = vperm.slane %v258, 0
        %v303 = vperm.slane %v259, 0
        %v304 = vperm.slane %v260, 0
        %v305 = vperm.slane %v261, 0
        %306 = vset.pattern.permute.xlu0 0
        %307 = vperm.xlu0 %306, %v302
        %v308 = vpop.permute.xlu0 %307
        %310 = vset.pattern.permute.xlu0 0
        %311 = vperm.xlu0 %310, %v303
        %v312 = vpop.permute.xlu0 %311
        %314 = vset.pattern.permute.xlu0 0
        %315 = vperm.xlu0 %314, %v304
        %v316 = vpop.permute.xlu0 %315
        %318 = vset.pattern.permute.xlu0 0
        %319 = vperm.xlu0 %318, %v305
        %v320 = vpop.permute.xlu0 %319
        %v322 = vadd.f32 %v294, %v308
        %v323 = vadd.f32 %v295, %v312
        %v324 = vadd.f32 %v296, %v316
        %v325 = vadd.f32 %v297, %v320
        %326 = vst [vmem:[%s207] sm:$0x3] %v322
        %327 = vst [vmem:[%s207 + $0x2] sm:$0x3] %v323
        %328 = vst [vmem:[%s207 + $0x4] sm:$0x3] %v324
        %329 = vst [vmem:[%s207 + $0x6] sm:$0x3] %v325
        %s330 = sand.u32 %s112, 1
        %s331 = scalar_lea.sflag [#allocation4], %s330
        %s332 = sand.u32 %s112, 1
        %s333 = smul.addr %s332, 8
        %s334 = scalar_lea.vmem [#allocation5], %s333
        // Predicated region
        $region37: #{tpu_custom_call.1} parent=31 // pred_check
          %p335 = pneg %p122
        $region38: #{tpu_custom_call.1} parent=31 // pred_check_branch
          %337 = sbr.rel (%p335) target = $region40
        $region39: #{tpu_custom_call.1} parent=31 // pred_region
          %339 = vsyncadd %s331, 0
          %s340 = smul.addr %s24, 4
          %s341 = sadd.s32 %s25, %s340
          %s342 = smul.addr %s341, 2
          %s343 = scalar_lea.hbm %s3, %s342
          %s344 = sshll.u32 %s334, 4
          %s345 = int_to_ptr.vmem [resolvable:$true] %s344
          %s346 = sshll.u32 %s343, 4
          %s347 = int_to_ptr.hbm [resolvable:$true] %s346
          %352 = dma.vmem_to_hbm [thread:$0]  %s345, 128, %s347, %s331, 32, 32, 2
        $region40: #{tpu_custom_call.1} parent=31 // pred_fallthru
          _
      $region32: #{tpu_custom_call.1} parent=5 // pred_fallthru
        _
      %p353 = scmp.le.s32.totalorder 2, %s15
      // Predicated region
      $region41: #{tpu_custom_call.1} parent=5 // pred_check
        %p354 = pneg %p353
      $region42: #{tpu_custom_call.1} parent=5 // pred_check_branch
        %356 = sbr.rel (%p354) target = $region44
      $region43: #{tpu_custom_call.1} parent=5 // pred_region
        %s357 = ssub.s32 %s15, 2
        // Predicated region
        $region45: #{tpu_custom_call.1} parent=43 // pred_check
          %p358 = pneg %p128
        $region46: #{tpu_custom_call.1} parent=43 // pred_check_branch
          %360 = sbr.rel (%p358) target = $region48
        $region47: #{tpu_custom_call.1} parent=43 // pred_region
          %s361 = sand.u32 %s113, 1
          %s362 = scalar_lea.sflag [#allocation4], %s361
          %s363 = sand.u32 %s113, 1
          %s364 = smul.addr %s363, 8
          %s365 = scalar_lea.vmem [#allocation5], %s364
          %367 = dma.done %s362, 128
        $region48: #{tpu_custom_call.1} parent=43 // pred_fallthru
          _
      $region44: #{tpu_custom_call.1} parent=5 // pred_fallthru
        _
    $region6: #{tpu_custom_call.1} parent=1 // loop_footer
      %s19 = sadd.s32 1, %s15
    $region7: #{tpu_custom_call.1} parent=1 // loop_footer_branch
      %14 = sbr.rel target = $region3
    $region8: #{tpu_custom_call.1} parent=1 // loop_exit
      _
    %368 = vsyncpa [#allocation3], 1
    %s369 = scalar_lea.sflag [#allocation3], 1
    %370 = vsyncpa %s369, 1
    %371 = vsyncpa [#allocation4], 1
    %s372 = scalar_lea.sflag [#allocation4], 1
    %373 = vsyncpa %s372, 1

</llo_original>
